<compile_context>
chip_gen: v5e
topology: v5e:2x2
jax: 0.10.0
libtpu: 0.0.40
codegen_flags: <defaults>
</compile_context>

<pallas_src>
import functools
import math

import jax
import jax.numpy as jnp
import numpy as np
from jax.experimental import pallas as pl
from jax.experimental.pallas import tpu as pltpu

# WingLoss constants (w=10, e=2) from the module __init__.
_W = 10.0
_E = 2.0
_C = _W - _W * math.log(1.0 + _W / _E)

_LANE = 128
_MAX_BLOCK_ROWS = 4096   # (4096, 128): 2 MiB f32 / 1 MiB bf16 per input block


def _num_tensorcores():
    """Best-effort TensorCore count (1 on v5e/v6e, 2 on v7x)."""
    try:
        info = pltpu.get_tpu_info()
    except Exception:
        return 1
    for attr in ("num_cores", "core_count", "num_tensorcores", "tensorcore_count"):
        n = getattr(info, attr, None)
        if isinstance(n, (int, np.integer)) and int(n) > 0:
            return int(n)
    return 1


def _kpt_loss_kernel(pred_ref, true_ref, mask_ref, outy_ref, outm_ref,
                     acc_y, acc_m, *,
                     rows, block_rows, core1_offset_blocks, core0_rows):
    c = pl.program_id(0)   # core slice (parallel)
    i = pl.program_id(1)   # block within the core slice (reduction)

    @pl.when(i == 0)
    def _():
        acc_y[...] = jnp.zeros_like(acc_y)
        acc_m[...] = jnp.zeros_like(acc_m)

    # Native-dtype DMA (bf16 / int8 supported), cast in-kernel: halves-or-more
    # the HBM traffic vs streaming f32.
    p = pred_ref[...].astype(jnp.float32)
    t = true_ref[...].astype(jnp.float32)
    m = mask_ref[...].astype(jnp.float32)

    # KPTLoss: x = pred * mask, target = truel * mask, then WingLoss where the
    # weight is zeroed at target == -1.
    x = p * m
    tt = t * m
    keep = tt != -1.0

    # block_idx = c * core1_offset + i matches the (affine) index_map, so the
    # row ids below correspond to the data actually loaded into the refs.
    block_idx = c * core1_offset_blocks + i
    row0 = block_idx * block_rows
    lower = c * core0_rows                       # de-dup boundary for core 1
    # Edge blocks: partial last block of the array, or core 1's overlap block.
    is_edge = jnp.logical_or(row0 + block_rows > rows, row0 < lower)

    def wing_partial(sel):
        # diff == 0 on deselected elements => y = w*log(1+0) = 0 contribution.
        diff = jnp.where(sel, x - tt, 0.0)
        ad = jnp.abs(diff)
        y = jnp.where(ad < _W, _W * jnp.log(1.0 + ad * (1.0 / _E)), ad - _C)
        # Sublane fold (XLU + vreg adds) -> (1, 128); avoids a block-sized
        # accumulator read-modify-write in VMEM.
        return jnp.sum(y, axis=0, keepdims=True)

    @pl.when(is_edge)
    def _():
        row_ids = row0 + jax.lax.broadcasted_iota(
            jnp.int32, (block_rows, _LANE), 0)
        # valid: (a) drop rows past the real array (partial last block),
        #        (b) core 1 only owns rows >= core0_rows (overlap de-dup).
        valid = (row_ids >= lower) & (row_ids < rows)
        acc_y[...] += wing_partial(valid & keep)
        acc_m[...] += jnp.sum(jnp.where(valid, m, 0.0), axis=0, keepdims=True)

    @pl.when(jnp.logical_not(is_edge))
    def _():
        # Interior fast path: no iota, no validity compares/ANDs/selects.
        acc_y[...] += wing_partial(keep)
        acc_m[...] += jnp.sum(m, axis=0, keepdims=True)

    @pl.when(i == pl.num_programs(1) - 1)
    def _():
        # Lane-dense (1, 128) partial-sum row per core slice.
        outy_ref[0] = acc_y[...]
        outm_ref[0] = acc_m[...]


def kpt_loss(pred, truel, mask, *, max_block_rows=_MAX_BLOCK_ROWS, ncores=None):
    """KPTLoss.forward(pred, truel, mask) -> scalar float32 loss.

    Inputs are streamed at their native dtype (pass bf16 pred/true and
    int8/bool mask for the lowest HBM traffic); upcast to f32 happens inside
    the kernel.  -1.0 "ignore" targets are exactly representable in bf16.
    """
    if mask.dtype == jnp.bool_:
        mask = mask.astype(jnp.int8)

    n = pred.size
    rows = pl.cdiv(n, _LANE)
    pad = rows * _LANE - n

    def prep(a):
        a = a.reshape(-1)
        if pad:  # static check; zero padding is exact (mask=0 -> y=0, m=0)
            a = jnp.pad(a, (0, pad))
        return a.reshape(rows, _LANE)

    p2, t2, m2 = prep(pred), prep(truel), prep(mask)

    cap = max(8, (max_block_rows // 8) * 8)          # keep multiple of 8
    block_rows = rows if rows <= cap else cap        # full-dim or 8-multiple
    steps_total = pl.cdiv(rows, block_rows)

    if ncores is None:
        ncores = _num_tensorcores()
    # The overlap/de-dup index math below supports at most a 2-way split.
    ncores = max(1, min(int(ncores), 2, steps_total))
    steps_per_core = pl.cdiv(steps_total, ncores)
    # Core 0 handles blocks [0, spc); core 1 handles [steps_total - spc,
    # steps_total) (always in-bounds).  Any overlap block is counted only by
    # core 0 via the in-kernel `lower` mask.
    core1_offset_blocks = steps_total - steps_per_core
    core0_rows = steps_per_core * block_rows

    in_spec = pl.BlockSpec(
        (block_rows, _LANE),
        lambda c, i: (c * core1_offset_blocks + i, 0))
    out_spec = pl.BlockSpec((1, 1, _LANE), lambda c, i: (c, 0, 0))
    out_sds = jax.ShapeDtypeStruct((ncores, 1, _LANE), jnp.float32)

    kernel = functools.partial(
        _kpt_loss_kernel,
        rows=rows, block_rows=block_rows,
        core1_offset_blocks=core1_offset_blocks, core0_rows=core0_rows)

    out_y, out_m = pl.pallas_call(
        kernel,
        out_shape=(out_sds, out_sds),
        grid_spec=pltpu.PrefetchScalarGridSpec(
            num_scalar_prefetch=0,
            grid=(ncores, steps_per_core),
            in_specs=[in_spec, in_spec, in_spec],
            out_specs=(out_spec, out_spec),
            scratch_shapes=[
                pltpu.VMEM((1, _LANE), jnp.float32),
                pltpu.VMEM((1, _LANE), jnp.float32),
            ],
        ),
        compiler_params=pltpu.CompilerParams(
            dimension_semantics=("parallel", "arbitrary"),
            vmem_limit_bytes=32 * 1024 * 1024,
        ),
    )(p2, t2, m2)

    # Tiny cross-core / cross-lane combine + final divide (matches
    # loss / (sum(mask) + 1e-13)).
    return jnp.sum(out_y) / (jnp.sum(out_m) + 1e-13)


def _kpt_loss_ref(pred, truel, mask):
    """High-precision numpy reference of KPTLoss.forward (on the exact values
    the kernel sees, i.e. after any bf16/int8 quantization of the inputs)."""
    p = np.asarray(jnp.asarray(pred, jnp.float32)).astype(np.float64)
    t = np.asarray(jnp.asarray(truel, jnp.float32)).astype(np.float64)
    m = np.asarray(jnp.asarray(mask, jnp.float32)).astype(np.float64)
    x = p * m
    tt = t * m
    weight = np.where(tt == -1.0, 0.0, 1.0)
    diff = weight * (x - tt)
    abs_diff = np.abs(diff)
    flag = (abs_diff < _W).astype(np.float64)
    y = flag * _W * np.log(1.0 + abs_diff / _E) + (1.0 - flag) * (abs_diff - _C)
    return y.sum() / (m.sum() + 1e-13)


if __name__ == "__main__":
    key = jax.random.PRNGKey(0)

    def make_inputs(k, shape, pt_dtype=jnp.float32, m_dtype=jnp.float32):
        k1, k2, k3, k4 = jax.random.split(k, 4)
        pred = jax.random.normal(k1, shape, dtype=jnp.float32) * 5.0
        truel = jax.random.normal(k2, shape, dtype=jnp.float32) * 5.0
        # Sprinkle some -1 "ignore" targets to exercise the weight zeroing.
        truel = jnp.where(jax.random.uniform(k4, shape) < 0.1, -1.0, truel)
        mask = jax.random.uniform(k3, shape) > 0.3
        return pred.astype(pt_dtype), truel.astype(pt_dtype), mask.astype(m_dtype)

    # (shape, block-row cap, pred/true dtype, mask dtype, forced ncores)
    # Small shapes that still exercise every code path: single block (f32),
    # lane-padding branch with bf16+int8 inputs, multi-block with the 2-way
    # core split / overlap de-dup / partial last block, and single-core
    # multi-block with an edge (partial) last block.
    cases = [
        ((2, 8, 2, 16), _MAX_BLOCK_ROWS, jnp.float32, jnp.float32, None),
        ((2, 8, 2, 17), _MAX_BLOCK_ROWS, jnp.bfloat16, jnp.int8, None),
        ((2, 8, 2, 300), 16, jnp.float32, jnp.float32, 2),
        ((2, 8, 2, 100), 16, jnp.bfloat16, jnp.int8, 1),
    ]
    keys = jax.random.split(key, len(cases))
    for k, (shape, cap, pt_dt, m_dt, nc) in zip(keys, cases):
        pred, truel, mask = make_inputs(k, shape, pt_dt, m_dt)
        loss = kpt_loss(pred, truel, mask, max_block_rows=cap, ncores=nc)
        jax.block_until_ready(loss)
        ref = _kpt_loss_ref(pred, truel, mask)
        assert jnp.allclose(loss, jnp.float32(ref), rtol=1e-4, atol=1e-6), \
            (shape, str(pt_dt), float(loss), float(ref))

    print("KERNEL_OK")
</pallas_src>

<mosaic_0001>
module attributes {stable_mosaic.version = 11 : i64} {
  func.func @_kpt_loss_kernel(%arg0: i32, %arg1: i32, %arg2: memref<4x128xf32, #tpu.memory_space<vmem>>, %arg3: memref<4x128xf32, #tpu.memory_space<vmem>>, %arg4: memref<4x128xf32, #tpu.memory_space<vmem>>, %arg5: memref<1x1x128xf32, #tpu.memory_space<vmem>>, %arg6: memref<1x1x128xf32, #tpu.memory_space<vmem>>, %arg7: memref<1x128xf32, #tpu.memory_space<vmem>>, %arg8: memref<1x128xf32, #tpu.memory_space<vmem>>) attributes {dimension_semantics = [#tpu.dimension_semantics<parallel>, #tpu.dimension_semantics<arbitrary>], iteration_bounds = array<i64: 1, 1>, scalar_prefetch = 0 : i64, scratch_operands = 2 : i64, tpu.core_type = #tpu.core_type<tc>, window_params = [{transform_indices = @transform_0, window_bounds = array<i64: 4, 128>}, {transform_indices = @transform_1, window_bounds = array<i64: 4, 128>}, {transform_indices = @transform_2, window_bounds = array<i64: 4, 128>}, {transform_indices = @transform_3, window_bounds = array<i64: 1, 1, 128>}, {transform_indices = @transform_4, window_bounds = array<i64: 1, 1, 128>}]} {
    %c0_i32 = arith.constant 0 : i32
    %0 = arith.cmpi eq, %arg1, %c0_i32 : i32
    %1 = arith.extui %0 : i1 to i32
    %c0_i32_0 = arith.constant 0 : i32
    %2 = arith.cmpi ne, %1, %c0_i32_0 : i32
    scf.if %2 {
      %cst_14 = arith.constant 0.000000e+00 : f32
      %26 = vector.broadcast %cst_14 : f32 to vector<1x128xf32>
      %c0_15 = arith.constant 0 : index
      %c0_16 = arith.constant 0 : index
      %27 = vector.load %arg7[%c0_15, %c0_16] : memref<1x128xf32, #tpu.memory_space<vmem>>, vector<1x128xf32>
      tpu.vector_store %arg7[%c0_15, %c0_16], %26 {strides = array<i32>} : memref<1x128xf32, #tpu.memory_space<vmem>>, vector<1x128xf32>,
      %cst_17 = arith.constant 0.000000e+00 : f32
      %28 = vector.broadcast %cst_17 : f32 to vector<1x128xf32>
      %c0_18 = arith.constant 0 : index
      %c0_19 = arith.constant 0 : index
      %29 = vector.load %arg8[%c0_18, %c0_19] : memref<1x128xf32, #tpu.memory_space<vmem>>, vector<1x128xf32>
      tpu.vector_store %arg8[%c0_18, %c0_19], %28 {strides = array<i32>} : memref<1x128xf32, #tpu.memory_space<vmem>>, vector<1x128xf32>,
    } else {
    }
    %c0 = arith.constant 0 : index
    %c0_1 = arith.constant 0 : index
    %3 = vector.load %arg2[%c0, %c0_1] : memref<4x128xf32, #tpu.memory_space<vmem>>, vector<4x128xf32>
    %c0_2 = arith.constant 0 : index
    %c0_3 = arith.constant 0 : index
    %4 = vector.load %arg3[%c0_2, %c0_3] : memref<4x128xf32, #tpu.memory_space<vmem>>, vector<4x128xf32>
    %c0_4 = arith.constant 0 : index
    %c0_5 = arith.constant 0 : index
    %5 = vector.load %arg4[%c0_4, %c0_5] : memref<4x128xf32, #tpu.memory_space<vmem>>, vector<4x128xf32>
    %6 = arith.mulf %3, %5 : vector<4x128xf32>
    %7 = arith.mulf %4, %5 : vector<4x128xf32>
    %cst = arith.constant -1.000000e+00 : f32
    %8 = vector.broadcast %cst : f32 to vector<4x128xf32>
    %9 = arith.cmpf one, %7, %8 : vector<4x128xf32>
    %c0_i32_6 = arith.constant 0 : i32
    %10 = arith.muli %arg0, %c0_i32_6 : i32
    %11 = arith.addi %10, %arg1 : i32
    %c4_i32 = arith.constant 4 : i32
    %12 = arith.muli %11, %c4_i32 : i32
    %c4_i32_7 = arith.constant 4 : i32
    %13 = arith.muli %arg0, %c4_i32_7 : i32
    %c4_i32_8 = arith.constant 4 : i32
    %14 = arith.addi %12, %c4_i32_8 : i32
    %c4_i32_9 = arith.constant 4 : i32
    %15 = arith.cmpi sgt, %14, %c4_i32_9 : i32
    %16 = arith.cmpi slt, %12, %13 : i32
    %17 = arith.ori %15, %16 : i1
    %18 = arith.extui %17 : i1 to i32
    %c0_i32_10 = arith.constant 0 : i32
    %19 = arith.cmpi ne, %18, %c0_i32_10 : i32
    scf.if %19 {
      %26 = tpu.iota {dimensions = array<i32: 0>} : vector<4x128xi32>
      %27 = vector.broadcast %12 : i32 to vector<4x128xi32>
      %28 = arith.addi %27, %26 : vector<4x128xi32>
      %29 = vector.broadcast %13 : i32 to vector<4x128xi32>
      %30 = arith.cmpi sge, %28, %29 : vector<4x128xi32>
      %c4_i32_14 = arith.constant 4 : i32
      %31 = vector.broadcast %c4_i32_14 : i32 to vector<4x128xi32>
      %32 = arith.cmpi slt, %28, %31 : vector<4x128xi32>
      %33 = arith.andi %30, %32 : vector<4x128xi1>
      %c0_15 = arith.constant 0 : index
      %c0_16 = arith.constant 0 : index
      %34 = vector.load %arg7[%c0_15, %c0_16] : memref<1x128xf32, #tpu.memory_space<vmem>>, vector<1x128xf32>
      %35 = arith.andi %33, %9 : vector<4x128xi1>
      %36 = arith.subf %6, %7 : vector<4x128xf32>
      %cst_17 = arith.constant 0.000000e+00 : f32
      %37 = vector.broadcast %cst_17 : f32 to vector<4x128xf32>
      %38 = arith.select %35, %36, %37 : vector<4x128xi1>, vector<4x128xf32>
      %39 = math.absf %38 : vector<4x128xf32>
      %cst_18 = arith.constant 1.000000e+01 : f32
      %40 = vector.broadcast %cst_18 : f32 to vector<4x128xf32>
      %41 = arith.cmpf olt, %39, %40 : vector<4x128xf32>
      %cst_19 = arith.constant 5.000000e-01 : f32
      %42 = vector.broadcast %cst_19 : f32 to vector<4x128xf32>
      %43 = arith.mulf %39, %42 : vector<4x128xf32>
      %cst_20 = arith.constant 1.000000e+00 : f32
      %44 = vector.broadcast %cst_20 : f32 to vector<4x128xf32>
      %45 = arith.addf %44, %43 : vector<4x128xf32>
      %46 = math.log %45 : vector<4x128xf32>
      %cst_21 = arith.constant 1.000000e+01 : f32
      %47 = vector.broadcast %cst_21 : f32 to vector<4x128xf32>
      %48 = arith.mulf %47, %46 : vector<4x128xf32>
      %cst_22 = arith.constant -7.9175949 : f32
      %49 = vector.broadcast %cst_22 : f32 to vector<4x128xf32>
      %50 = arith.subf %39, %49 : vector<4x128xf32>
      %51 = arith.select %41, %48, %50 : vector<4x128xi1>, vector<4x128xf32>
      %cst_23 = arith.constant dense<0.000000e+00> : vector<128xf32>
      %52 = vector.multi_reduction <add>, %51, %cst_23 [0] : vector<4x128xf32> to vector<128xf32>
      %53 = vector.shape_cast %52 : vector<128xf32> to vector<1x128xf32>
      %54 = arith.addf %34, %53 : vector<1x128xf32>
      %c0_24 = arith.constant 0 : index
      %c0_25 = arith.constant 0 : index
      %55 = vector.load %arg7[%c0_24, %c0_25] : memref<1x128xf32, #tpu.memory_space<vmem>>, vector<1x128xf32>
      tpu.vector_store %arg7[%c0_24, %c0_25], %54 {strides = array<i32>} : memref<1x128xf32, #tpu.memory_space<vmem>>, vector<1x128xf32>,
      %c0_26 = arith.constant 0 : index
      %c0_27 = arith.constant 0 : index
      %56 = vector.load %arg8[%c0_26, %c0_27] : memref<1x128xf32, #tpu.memory_space<vmem>>, vector<1x128xf32>
      %cst_28 = arith.constant 0.000000e+00 : f32
      %57 = vector.broadcast %cst_28 : f32 to vector<4x128xf32>
      %58 = arith.select %33, %5, %57 : vector<4x128xi1>, vector<4x128xf32>
      %cst_29 = arith.constant dense<0.000000e+00> : vector<128xf32>
      %59 = vector.multi_reduction <add>, %58, %cst_29 [0] : vector<4x128xf32> to vector<128xf32>
      %60 = vector.shape_cast %59 : vector<128xf32> to vector<1x128xf32>
      %61 = arith.addf %56, %60 : vector<1x128xf32>
      %c0_30 = arith.constant 0 : index
      %c0_31 = arith.constant 0 : index
      %62 = vector.load %arg8[%c0_30, %c0_31] : memref<1x128xf32, #tpu.memory_space<vmem>>, vector<1x128xf32>
      tpu.vector_store %arg8[%c0_30, %c0_31], %61 {strides = array<i32>} : memref<1x128xf32, #tpu.memory_space<vmem>>, vector<1x128xf32>,
    } else {
    }
    %true = arith.constant true
    %20 = arith.xori %17, %true : i1
    %21 = arith.extui %20 : i1 to i32
    %c0_i32_11 = arith.constant 0 : i32
    %22 = arith.cmpi ne, %21, %c0_i32_11 : i32
    scf.if %22 {
      %c0_14 = arith.constant 0 : index
      %c0_15 = arith.constant 0 : index
      %26 = vector.load %arg7[%c0_14, %c0_15] : memref<1x128xf32, #tpu.memory_space<vmem>>, vector<1x128xf32>
      %27 = arith.subf %6, %7 : vector<4x128xf32>
      %cst_16 = arith.constant 0.000000e+00 : f32
      %28 = vector.broadcast %cst_16 : f32 to vector<4x128xf32>
      %29 = arith.select %9, %27, %28 : vector<4x128xi1>, vector<4x128xf32>
      %30 = math.absf %29 : vector<4x128xf32>
      %cst_17 = arith.constant 1.000000e+01 : f32
      %31 = vector.broadcast %cst_17 : f32 to vector<4x128xf32>
      %32 = arith.cmpf olt, %30, %31 : vector<4x128xf32>
      %cst_18 = arith.constant 5.000000e-01 : f32
      %33 = vector.broadcast %cst_18 : f32 to vector<4x128xf32>
      %34 = arith.mulf %30, %33 : vector<4x128xf32>
      %cst_19 = arith.constant 1.000000e+00 : f32
      %35 = vector.broadcast %cst_19 : f32 to vector<4x128xf32>
      %36 = arith.addf %35, %34 : vector<4x128xf32>
      %37 = math.log %36 : vector<4x128xf32>
      %cst_20 = arith.constant 1.000000e+01 : f32
      %38 = vector.broadcast %cst_20 : f32 to vector<4x128xf32>
      %39 = arith.mulf %38, %37 : vector<4x128xf32>
      %cst_21 = arith.constant -7.9175949 : f32
      %40 = vector.broadcast %cst_21 : f32 to vector<4x128xf32>
      %41 = arith.subf %30, %40 : vector<4x128xf32>
      %42 = arith.select %32, %39, %41 : vector<4x128xi1>, vector<4x128xf32>
      %cst_22 = arith.constant dense<0.000000e+00> : vector<128xf32>
      %43 = vector.multi_reduction <add>, %42, %cst_22 [0] : vector<4x128xf32> to vector<128xf32>
      %44 = vector.shape_cast %43 : vector<128xf32> to vector<1x128xf32>
      %45 = arith.addf %26, %44 : vector<1x128xf32>
      %c0_23 = arith.constant 0 : index
      %c0_24 = arith.constant 0 : index
      %46 = vector.load %arg7[%c0_23, %c0_24] : memref<1x128xf32, #tpu.memory_space<vmem>>, vector<1x128xf32>
      tpu.vector_store %arg7[%c0_23, %c0_24], %45 {strides = array<i32>} : memref<1x128xf32, #tpu.memory_space<vmem>>, vector<1x128xf32>,
      %c0_25 = arith.constant 0 : index
      %c0_26 = arith.constant 0 : index
      %47 = vector.load %arg8[%c0_25, %c0_26] : memref<1x128xf32, #tpu.memory_space<vmem>>, vector<1x128xf32>
      %cst_27 = arith.constant dense<0.000000e+00> : vector<128xf32>
      %48 = vector.multi_reduction <add>, %5, %cst_27 [0] : vector<4x128xf32> to vector<128xf32>
      %49 = vector.shape_cast %48 : vector<128xf32> to vector<1x128xf32>
      %50 = arith.addf %47, %49 : vector<1x128xf32>
      %c0_28 = arith.constant 0 : index
      %c0_29 = arith.constant 0 : index
      %51 = vector.load %arg8[%c0_28, %c0_29] : memref<1x128xf32, #tpu.memory_space<vmem>>, vector<1x128xf32>
      tpu.vector_store %arg8[%c0_28, %c0_29], %50 {strides = array<i32>} : memref<1x128xf32, #tpu.memory_space<vmem>>, vector<1x128xf32>,
    } else {
    }
    %c0_i32_12 = arith.constant 0 : i32
    %23 = arith.cmpi eq, %arg1, %c0_i32_12 : i32
    %24 = arith.extui %23 : i1 to i32
    %c0_i32_13 = arith.constant 0 : i32
    %25 = arith.cmpi ne, %24, %c0_i32_13 : i32
    scf.if %25 {
      %c0_14 = arith.constant 0 : index
      %c0_15 = arith.constant 0 : index
      %26 = vector.load %arg7[%c0_14, %c0_15] : memref<1x128xf32, #tpu.memory_space<vmem>>, vector<1x128xf32>
      %c0_16 = arith.constant 0 : index
      %c0_17 = arith.constant 0 : index
      %c0_18 = arith.constant 0 : index
      %27 = vector.load %arg5[%c0_16, %c0_17, %c0_18] : memref<1x1x128xf32, #tpu.memory_space<vmem>>, vector<1x1x128xf32>
      %28 = vector.shape_cast %27 : vector<1x1x128xf32> to vector<1x128xf32>
      %29 = vector.shape_cast %26 : vector<1x128xf32> to vector<1x1x128xf32>
      tpu.vector_store %arg5[%c0_16, %c0_17, %c0_18], %29 {strides = array<i32>} : memref<1x1x128xf32, #tpu.memory_space<vmem>>, vector<1x1x128xf32>,
      %c0_19 = arith.constant 0 : index
      %c0_20 = arith.constant 0 : index
      %30 = vector.load %arg8[%c0_19, %c0_20] : memref<1x128xf32, #tpu.memory_space<vmem>>, vector<1x128xf32>
      %c0_21 = arith.constant 0 : index
      %c0_22 = arith.constant 0 : index
      %c0_23 = arith.constant 0 : index
      %31 = vector.load %arg6[%c0_21, %c0_22, %c0_23] : memref<1x1x128xf32, #tpu.memory_space<vmem>>, vector<1x1x128xf32>
      %32 = vector.shape_cast %31 : vector<1x1x128xf32> to vector<1x128xf32>
      %33 = vector.shape_cast %30 : vector<1x128xf32> to vector<1x1x128xf32>
      tpu.vector_store %arg6[%c0_21, %c0_22, %c0_23], %33 {strides = array<i32>} : memref<1x1x128xf32, #tpu.memory_space<vmem>>, vector<1x1x128xf32>,
    } else {
    }
    return
  }
  func.func @transform_0(%arg0: i32, %arg1: i32) -> (i32, i32) {
    %c0_i32 = arith.constant 0 : i32
    %0 = arith.muli %arg0, %c0_i32 : i32
    %1 = arith.addi %0, %arg1 : i32
    %c0_i32_0 = arith.constant 0 : i32
    %c0_i32_1 = arith.constant 0 : i32
    return %1, %c0_i32_0 : i32, i32
  }
  func.func @transform_1(%arg0: i32, %arg1: i32) -> (i32, i32) {
    %c0_i32 = arith.constant 0 : i32
    %0 = arith.muli %arg0, %c0_i32 : i32
    %1 = arith.addi %0, %arg1 : i32
    %c0_i32_0 = arith.constant 0 : i32
    %c0_i32_1 = arith.constant 0 : i32
    return %1, %c0_i32_0 : i32, i32
  }
  func.func @transform_2(%arg0: i32, %arg1: i32) -> (i32, i32) {
    %c0_i32 = arith.constant 0 : i32
    %0 = arith.muli %arg0, %c0_i32 : i32
    %1 = arith.addi %0, %arg1 : i32
    %c0_i32_0 = arith.constant 0 : i32
    %c0_i32_1 = arith.constant 0 : i32
    return %1, %c0_i32_0 : i32, i32
  }
  func.func @transform_3(%arg0: i32, %arg1: i32) -> (i32, i32, i32) {
    %c0_i32 = arith.constant 0 : i32
    %c0_i32_0 = arith.constant 0 : i32
    %c0_i32_1 = arith.constant 0 : i32
    return %arg0, %c0_i32, %c0_i32_0 : i32, i32, i32
  }
  func.func @transform_4(%arg0: i32, %arg1: i32) -> (i32, i32, i32) {
    %c0_i32 = arith.constant 0 : i32
    %c0_i32_0 = arith.constant 0 : i32
    %c0_i32_1 = arith.constant 0 : i32
    return %arg0, %c0_i32, %c0_i32_0 : i32, i32, i32
  }
}

</mosaic_0001>

<llo_original>
// kernel: tpu_custom_call.1
$region0: #{tpu_custom_call.1}
  #allocation0 [shape = 'u32[]', space=smem, size = 0x4, offset = 0x4, fixed_abs, tag = 'smem constant byte address 0x4 - core index']
  #allocation1 [shape = 'u32[72,128]{1,0:T(1,128)}', space=vmem, size = 0x9000, scoped, tag = 'internal scratch']
  #allocation2 [shape = 'f32[1,128]{1,0:T(1,128)}', space=vmem, size = 0x200, scoped, tag = 'scratch operand']
  #allocation3 [shape = 'f32[1,128]{1,0:T(1,128)}', space=vmem, size = 0x200, scoped, tag = 'scratch operand']
  %s0 = inlined_call_operand.hbm [shape: f32[4,128], index: 0, kind: input, shape index: {}]
  %s1 = inlined_call_operand.hbm [shape: f32[4,128], index: 1, kind: input, shape index: {}]
  %s2 = inlined_call_operand.hbm [shape: f32[4,128], index: 2, kind: input, shape index: {}]
  %s3 = inlined_call_operand.hbm [shape: f32[1,1,128], index: 3, kind: output, shape index: {0}]
  %s4 = inlined_call_operand.hbm [shape: f32[1,1,128], index: 4, kind: output, shape index: {1}]
  %5 = xla_tuple %s3, %s4
  %s6 = sld [smem:[#allocation0]]
  $region58: #{tpu_custom_call.1} parent=0
    _
  %s8 = ssub.s32 1, %s6
  %s9 = scalar_select 0, %s8, %s6
  $region1: #{tpu_custom_call.1} parent=0
    #allocation4 [shape = 'u8[2048]{0}', space=vmem, size = 0x800, scoped, tag = 'input window, operand 0, single buffered']
    #allocation5 [shape = 's32[1]{0}', space=sflag, size = 0x4, scoped, tag = 'scoped memory for tpu_custom_call.1']
    #allocation6 [shape = 's32[1]{0}', space=sflag, size = 0x4, scoped, tag = 'scoped memory for tpu_custom_call.1']
    #allocation7 [shape = 'u8[2048]{0}', space=vmem, size = 0x800, scoped, tag = 'input window, operand 1, single buffered']
    #allocation8 [shape = 's32[1]{0}', space=sflag, size = 0x4, scoped, tag = 'scoped memory for tpu_custom_call.1']
    #allocation9 [shape = 'u8[2048]{0}', space=vmem, size = 0x800, scoped, tag = 'input window, operand 2, single buffered']
    #allocation10 [shape = 'u8[512]{0}', space=vmem, size = 0x400, scoped, tag = 'output window, operand 0, single buffered']
    #allocation11 [shape = 'u8[512]{0}', space=vmem, size = 0x400, scoped, tag = 'output window, operand 1, single buffered']
    #allocation12 [shape = 's32[1]{0}', space=sflag, size = 0x4, scoped, tag = 'scoped memory for tpu_custom_call.1']
    %10 = vsyncpa [#allocation5], 0
    %11 = vsyncpa [#allocation8], 0
    %12 = vsyncpa [#allocation6], 0
    %13 = vsyncpa [#allocation12], 0
    // Predicated region
    $region2: #{tpu_custom_call.1} parent=1 // pred_check
      _
    $region3: #{tpu_custom_call.1} parent=1 // pred_check_branch
      %15 = sbr.rel (0) target = $region5
    $region4: #{tpu_custom_call.1} parent=1 // pred_region
      %17 = vsyncadd [#allocation5], 0
      %s19 = sshll.u32 %s0, 4
      %s20 = int_to_ptr.hbm [resolvable:$true] %s19
      %s21 = sshll.u32 [#allocation4], 4
      %s22 = int_to_ptr.vmem [resolvable:$true] %s21
      %24 = dma.hbm_to_vmem [thread:$0]  %s20, 64, %s22, [#allocation5]
    $region5: #{tpu_custom_call.1} parent=1 // pred_fallthru
      _
    // Predicated region
    $region6: #{tpu_custom_call.1} parent=1 // pred_check
      _
    $region7: #{tpu_custom_call.1} parent=1 // pred_check_branch
      %26 = sbr.rel (0) target = $region9
    $region8: #{tpu_custom_call.1} parent=1 // pred_region
      %28 = vsyncadd [#allocation8], 0
      %s30 = sshll.u32 %s1, 4
      %s31 = int_to_ptr.hbm [resolvable:$true] %s30
      %s32 = sshll.u32 [#allocation7], 4
      %s33 = int_to_ptr.vmem [resolvable:$true] %s32
      %35 = dma.hbm_to_vmem [thread:$0]  %s31, 64, %s33, [#allocation8]
    $region9: #{tpu_custom_call.1} parent=1 // pred_fallthru
      _
    // Predicated region
    $region10: #{tpu_custom_call.1} parent=1 // pred_check
      _
    $region11: #{tpu_custom_call.1} parent=1 // pred_check_branch
      %37 = sbr.rel (0) target = $region13
    $region12: #{tpu_custom_call.1} parent=1 // pred_region
      %39 = vsyncadd [#allocation8], 0
      %s41 = sshll.u32 %s2, 4
      %s42 = int_to_ptr.hbm [resolvable:$true] %s41
      %s43 = sshll.u32 [#allocation9], 4
      %s44 = int_to_ptr.vmem [resolvable:$true] %s43
      %46 = dma.hbm_to_vmem [thread:$0]  %s42, 64, %s44, [#allocation8]
    $region13: #{tpu_custom_call.1} parent=1 // pred_fallthru
      _
    // Predicated region
    $region14: #{tpu_custom_call.1} parent=1 // pred_check
      _
    $region15: #{tpu_custom_call.1} parent=1 // pred_check_branch
      %48 = sbr.rel (0) target = $region17
    $region16: #{tpu_custom_call.1} parent=1 // pred_region
      %50 = dma.done [#allocation5], 64
    $region17: #{tpu_custom_call.1} parent=1 // pred_fallthru
      _
    // Predicated region
    $region18: #{tpu_custom_call.1} parent=1 // pred_check
      _
    $region19: #{tpu_custom_call.1} parent=1 // pred_check_branch
      %52 = sbr.rel (0) target = $region21
    $region20: #{tpu_custom_call.1} parent=1 // pred_region
      %54 = dma.done [#allocation8], 64
    $region21: #{tpu_custom_call.1} parent=1 // pred_fallthru
      _
    // Predicated region
    $region22: #{tpu_custom_call.1} parent=1 // pred_check
      _
    $region23: #{tpu_custom_call.1} parent=1 // pred_check_branch
      %56 = sbr.rel (0) target = $region25
    $region24: #{tpu_custom_call.1} parent=1 // pred_region
      %58 = dma.done [#allocation8], 64
    $region25: #{tpu_custom_call.1} parent=1 // pred_fallthru
      _
    %p59 = scmp.eq.s32.totalorder 0, 0
    // Predicated region
    $region26: #{tpu_custom_call.1} parent=1 // pred_check
      %p60 = pneg %p59
    $region27: #{tpu_custom_call.1} parent=1 // pred_check_branch
      %62 = sbr.rel (%p60) target = $region29
    $region28: #{tpu_custom_call.1} parent=1 // pred_region
      %63 = vst [vmem:[#allocation2] sm:$0x1] 0.0
      %64 = vst [vmem:[#allocation3] sm:$0x1] 0.0
    $region29: #{tpu_custom_call.1} parent=1 // pred_fallthru
      _
    %v65 = vld [vmem:[#allocation4] sm:$0xf]
    %v66 = vld [vmem:[#allocation7] sm:$0xf]
    %v67 = vld [vmem:[#allocation9] sm:$0xf]
    %v68 = vmul.f32 %v65, %v67
    %v69 = vmul.f32 %v66, %v67
    %vm70 = vcmp.ne.f32.partialorder %v69, -1.0
    %s71 = smul.u32 0, 4
    %s72 = smul.u32 0, 4
    %s73 = sadd.s32 %s71, 4
    %p74 = scmp.gt.s32.totalorder %s73, 4
    %p75 = scmp.lt.s32.totalorder %s71, %s72
    %p76 = por %p74, %p75
    // Predicated region
    $region30: #{tpu_custom_call.1} parent=1 // pred_check
      %p77 = pneg %p76
    $region31: #{tpu_custom_call.1} parent=1 // pred_check_branch
      %79 = sbr.rel (%p77) target = $region33
    $region32: #{tpu_custom_call.1} parent=1 // pred_region
      %v80 = vlaneseq
      %v81 = vshrl.u32 %v80, 7
      %v82 = vstv %s71
      %v83 = vadd.s32 %v82, %v81
      %v84 = vstv %s72
      %vm85 = vcmp.ge.s32.totalorder %v83, %v84
      %vm86 = vcmp.lt.s32.totalorder %v83, 4
      %vm87 = vmand %vm85, %vm86
      %v88 = vld [vmem:[#allocation2] sm:$0x1]
      %vm89 = vmand %vm87, %vm70
      %v90 = vsub.f32 %v68, %v69
      %v91 = vsel %vm89, %v90, 0.0
      %v92 = vand.u32 2147483647, %v91
      %vm93 = vcmp.lt.f32.partialorder %v92, 10.0
      %v94 = vmul.f32 %v92, 0.5
      %v95 = vadd.f32 %v94, 1.0
      %v96 = vlog2.pop %v95
      %v97 = vmul.f32 %v96, 0.6931472
      %v98 = vmul.f32 %v97, 10.0
      %v99 = vsub.f32 %v92, -7.917595
      %v100 = vsel %vm93, %v98, %v99
      %vm101 = vcmask 1043456
      %v102 = vsel %vm101, %v100, 0.0
      %v103 = vrot.slane %v102, 4
      %v104 = vadd.f32 %v102, %v103
      %v105 = vrot.slane %v104, 2
      %v106 = vadd.f32 %v104, %v105
      %v107 = vrot.slane %v106, 1
      %v108 = vadd.f32 %v106, %v107
      %v109 = vadd.f32 %v88, %v108
      %110 = vst [vmem:[#allocation2] sm:$0x1] %v109
      %v111 = vld [vmem:[#allocation3] sm:$0x1]
      %v112 = vsel %vm87, %v67, 0.0
      %v113 = vsel %vm101, %v112, 0.0
      %v114 = vrot.slane %v113, 4
      %v115 = vadd.f32 %v113, %v114
      %v116 = vrot.slane %v115, 2
      %v117 = vadd.f32 %v115, %v116
      %v118 = vrot.slane %v117, 1
      %v119 = vadd.f32 %v117, %v118
      %v120 = vadd.f32 %v111, %v119
      %121 = vst [vmem:[#allocation3] sm:$0x1] %v120
    $region33: #{tpu_custom_call.1} parent=1 // pred_fallthru
      _
    %p122 = pneg %p76
    // Predicated region
    $region34: #{tpu_custom_call.1} parent=1 // pred_check
      _
    $region35: #{tpu_custom_call.1} parent=1 // pred_check_branch
      %124 = sbr.rel (%p76) target = $region37
    $region36: #{tpu_custom_call.1} parent=1 // pred_region
      %v125 = vld [vmem:[#allocation2] sm:$0x1]
      %v126 = vsub.f32 %v68, %v69
      %v127 = vsel %vm70, %v126, 0.0
      %v128 = vand.u32 2147483647, %v127
      %vm129 = vcmp.lt.f32.partialorder %v128, 10.0
      %v130 = vmul.f32 %v128, 0.5
      %v131 = vadd.f32 %v130, 1.0
      %v132 = vlog2.pop %v131
      %v133 = vmul.f32 %v132, 0.6931472
      %v134 = vmul.f32 %v133, 10.0
      %v135 = vsub.f32 %v128, -7.917595
      %v136 = vsel %vm129, %v134, %v135
      %vm137 = vcmask 1043456
      %v138 = vsel %vm137, %v136, 0.0
      %v139 = vrot.slane %v138, 4
      %v140 = vadd.f32 %v138, %v139
      %v141 = vrot.slane %v140, 2
      %v142 = vadd.f32 %v140, %v141
      %v143 = vrot.slane %v142, 1
      %v144 = vadd.f32 %v142, %v143
      %v145 = vadd.f32 %v125, %v144
      %146 = vst [vmem:[#allocation2] sm:$0x1] %v145
      %v147 = vld [vmem:[#allocation3] sm:$0x1]
      %v148 = vsel %vm137, %v67, 0.0
      %v149 = vrot.slane %v148, 4
      %v150 = vadd.f32 %v148, %v149
      %v151 = vrot.slane %v150, 2
      %v152 = vadd.f32 %v150, %v151
      %v153 = vrot.slane %v152, 1
      %v154 = vadd.f32 %v152, %v153
      %v155 = vadd.f32 %v147, %v154
      %156 = vst [vmem:[#allocation3] sm:$0x1] %v155
    $region37: #{tpu_custom_call.1} parent=1 // pred_fallthru
      _
    // Predicated region
    $region38: #{tpu_custom_call.1} parent=1 // pred_check
      %p157 = pneg %p59
    $region39: #{tpu_custom_call.1} parent=1 // pred_check_branch
      %159 = sbr.rel (%p157) target = $region41
    $region40: #{tpu_custom_call.1} parent=1 // pred_region
      %v160 = vld [vmem:[#allocation2] sm:$0x1]
      %161 = vst [vmem:[#allocation10] sm:$0x1] %v160
      %v162 = vld [vmem:[#allocation3] sm:$0x1]
      %163 = vst [vmem:[#allocation11] sm:$0x1] %v162
    $region41: #{tpu_custom_call.1} parent=1 // pred_fallthru
      _
    // Predicated region
    $region42: #{tpu_custom_call.1} parent=1 // pred_check
      _
    $region43: #{tpu_custom_call.1} parent=1 // pred_check_branch
      %165 = sbr.rel (0) target = $region45
    $region44: #{tpu_custom_call.1} parent=1 // pred_region
      %167 = vsyncadd [#allocation6], 0
      %s169 = sshll.u32 [#allocation10], 4
      %s170 = int_to_ptr.vmem [resolvable:$true] %s169
      %s171 = sshll.u32 %s3, 4
      %s172 = int_to_ptr.hbm [resolvable:$true] %s171
      %174 = dma.vmem_to_hbm [thread:$0]  %s170, 16, %s172, [#allocation6]
    $region45: #{tpu_custom_call.1} parent=1 // pred_fallthru
      _
    // Predicated region
    $region46: #{tpu_custom_call.1} parent=1 // pred_check
      _
    $region47: #{tpu_custom_call.1} parent=1 // pred_check_branch
      %176 = sbr.rel (0) target = $region49
    $region48: #{tpu_custom_call.1} parent=1 // pred_region
      %178 = vsyncadd [#allocation12], 0
      %s180 = sshll.u32 [#allocation11], 4
      %s181 = int_to_ptr.vmem [resolvable:$true] %s180
      %s182 = sshll.u32 %s4, 4
      %s183 = int_to_ptr.hbm [resolvable:$true] %s182
      %185 = dma.vmem_to_hbm [thread:$0]  %s181, 16, %s183, [#allocation12]
    $region49: #{tpu_custom_call.1} parent=1 // pred_fallthru
      _
    // Predicated region
    $region50: #{tpu_custom_call.1} parent=1 // pred_check
      _
    $region51: #{tpu_custom_call.1} parent=1 // pred_check_branch
      %187 = sbr.rel (0) target = $region53
    $region52: #{tpu_custom_call.1} parent=1 // pred_region
      %189 = dma.done [#allocation6], 16
    $region53: #{tpu_custom_call.1} parent=1 // pred_fallthru
      _
    // Predicated region
    $region54: #{tpu_custom_call.1} parent=1 // pred_check
      _
    $region55: #{tpu_custom_call.1} parent=1 // pred_check_branch
      %191 = sbr.rel (0) target = $region57
    $region56: #{tpu_custom_call.1} parent=1 // pred_region
      %193 = dma.done [#allocation12], 16
    $region57: #{tpu_custom_call.1} parent=1 // pred_fallthru
      _
    %194 = vsyncpa [#allocation5], 1
    %195 = vsyncpa [#allocation8], 1
    %196 = vsyncpa [#allocation6], 1
    %197 = vsyncpa [#allocation12], 1

</llo_original>
